<compile_context>
chip_gen: v7x
topology: tpu7x:2x2x1
jax: 0.10.0
libtpu: 0.0.40
codegen_flags: <defaults>
</compile_context>

<pallas_src>
import functools

import numpy as np
import jax
import jax.numpy as jnp
from jax import lax
from jax.experimental import pallas as pl
from jax.experimental.pallas import tpu as pltpu


_LANES = 128
_SUBLANES = 8
_MAX_BLOCK_ROWS = 2048    # (2048, 128) f32 = 1 MiB per input per buffer


def _round_up(x, m):
    return ((x + m - 1) // m) * m


def _num_tensorcores():
    """TensorCores per JAX device: 2 on megacore chips (v4/v5p/v7x), else 1."""
    try:
        kind = jax.devices()[0].device_kind.lower()
    except Exception:
        return 1
    if "lite" in kind or "v5e" in kind or "v6e" in kind:
        return 1
    for tag in ("v7", "7x", "v4", "v5p"):
        if tag in kind:
            return 2
    return 1


def _focal_loss_kernel(pred_ref, tgt_ref, out_ref, *,
                       edges, weights, min_val, max_val, penalty, gamma,
                       n_valid, scale, block_rows, chunks_per_core):
    """One (block_rows, 128) tile -> per-core accumulator; scalar on last step."""
    c = pl.program_id(0)   # core axis (size 1 on single-TC chips)
    i = pl.program_id(1)   # chunk axis within a core (reduction axis, last)

    @pl.when(i == 0)
    def _():
        out_ref[...] = jnp.zeros_like(out_ref)

    # Load in native dtype (f32 or bf16), compute in f32.
    p = pred_ref[...].astype(jnp.float32)
    t = tgt_ref[...].astype(jnp.float32)
    err = jnp.abs(p - t)

    # torch.bucketize(t, edges[1:], right=True) - 1, clamped to [0, nb-1],
    # then weights[idx]  ==  a monotone compare/select chain over the static
    # edge table: pure VPU, no gather, no integer index tensor.
    # NOTE: at 2 VPU ops/bin this is only appropriate for small num_bins
    # (default 10); a >99-bin config should switch to an arithmetic bin index
    # plus a different lookup mechanism instead of a 200-op chain.
    num_bins = len(weights)
    w = jnp.full(t.shape, jnp.float32(weights[0]), jnp.float32)
    for j in range(1, num_bins):
        w = jnp.where(t >= jnp.float32(edges[j + 1]), jnp.float32(weights[j]), w)

    # Out-of-bounds predictions get the flat penalty weight.
    oob = (p < jnp.float32(min_val)) | (p > jnp.float32(max_val))
    w = jnp.where(oob, jnp.float32(penalty), w)

    if gamma == 2.0:
        e = err * err                               # default gamma: no transcendental
    elif gamma == 1.0:
        e = err
    else:
        e = jnp.power(err, jnp.float32(gamma))      # EUP path for general gamma
    contrib = w * e                                 # (block_rows, 128) f32

    def accumulate(x):
        # Elementwise partial accumulation only (VPU); cross-lane reduction is
        # deferred to the final grid step.
        if block_rows % _SUBLANES == 0:
            out_ref[...] += jnp.sum(x.reshape(-1, _SUBLANES, _LANES), axis=0)
        else:  # tiny inputs where the single block is not a sublane multiple
            out_ref[0:1, :] += jnp.sum(x, axis=0, keepdims=True)

    # Flat element offset of this *logical* block (un-clamped), used both to
    # detect the ragged/partial tail and to kill clamped duplicate blocks.
    block_elems = block_rows * _LANES
    start = (c * chunks_per_core + i) * block_elems
    is_full = start + block_elems <= n_valid

    @pl.when(is_full)
    def _():                                        # hot path: no mask ops
        accumulate(contrib)

    @pl.when(jnp.logical_not(is_full))
    def _():                                        # at most one block per core
        rid = lax.broadcasted_iota(jnp.int32, contrib.shape, 0)
        cid = lax.broadcasted_iota(jnp.int32, contrib.shape, 1)
        local = rid * _LANES + cid
        limit = n_valid - start                     # <= 0 for fully-OOB blocks
        accumulate(jnp.where(local < limit, contrib, 0.0))

    # Fused epilogue: cross-sublane + cross-lane reduce (XLU, idle slots),
    # alpha/N scale, broadcast the per-core scalar into this core's block.
    @pl.when(i == pl.num_programs(1) - 1)
    def _():
        col = jnp.sum(out_ref[...], axis=0, keepdims=True)    # (1, 128)
        tot = jnp.sum(col, axis=1, keepdims=True)             # (1, 1)
        out_ref[...] = jnp.broadcast_to(tot * jnp.float32(scale), out_ref.shape)


def focal_loss_forward(predictions, targets, *, edges, weights, min_val,
                       max_val, alpha, gamma, penalty_factor, num_cores):
    """Pallas forward of FocalLossRegression; tables / scalars are static."""
    n = predictions.size
    pred = predictions.reshape(-1)     # flatten: bitcast, no HBM copy
    tgt = targets.reshape(-1)

    rem = n % _LANES
    if rem != 0:
        # Ragged fallback: one pad copy to reach lane alignment.  The aligned
        # path below is completely copy-free.
        # TODO(synk): handle the <128-element tail with a manual-DMA epilogue
        # so the full-array pad copy disappears for ragged N too.
        pad = _LANES - rem
        pred = jnp.pad(pred, (0, pad))
        tgt = jnp.pad(tgt, (0, pad))

    rows = pred.shape[0] // _LANES
    pred = pred.reshape(rows, _LANES)  # bitcast, no HBM copy
    tgt = tgt.reshape(rows, _LANES)

    # Tile selection: as large as possible (<= 1 MiB f32 per input per buffer),
    # multiple of 16 rows (covers bf16 sublane packing); tiny inputs fall back
    # to a single full-extent block.
    block_rows = min(_MAX_BLOCK_ROWS, _round_up(pl.cdiv(rows, num_cores), 16))
    if block_rows > rows:
        block_rows = rows
    blocks_total = pl.cdiv(rows, block_rows)
    num_cores_eff = max(1, min(num_cores, blocks_total))
    chunks_per_core = pl.cdiv(blocks_total, num_cores_eff)
    last_block = blocks_total - 1

    kernel = functools.partial(
        _focal_loss_kernel,
        edges=tuple(float(e) for e in edges),
        weights=tuple(float(v) for v in weights),
        min_val=float(min_val), max_val=float(max_val),
        penalty=float(penalty_factor), gamma=float(gamma),
        n_valid=n, scale=float(alpha) / float(max(n, 1)),
        block_rows=block_rows, chunks_per_core=chunks_per_core)

    # Clamp keeps every issued block start in-bounds; the duplicate blocks this
    # creates at the very end are masked to zero inside the kernel.
    def in_map(c, i):
        return (jnp.minimum(c * chunks_per_core + i, last_block), 0)

    out = pl.pallas_call(
        kernel,
        out_shape=jax.ShapeDtypeStruct((num_cores_eff * _SUBLANES, _LANES),
                                       jnp.float32),
        grid=(num_cores_eff, chunks_per_core),
        in_specs=[
            pl.BlockSpec((block_rows, _LANES), in_map),
            pl.BlockSpec((block_rows, _LANES), in_map),
        ],
        out_specs=pl.BlockSpec((_SUBLANES, _LANES), lambda c, i: (c, 0)),
        compiler_params=pltpu.CompilerParams(
            dimension_semantics=("parallel", "arbitrary")),
    )(pred, tgt)

    # Each core's (8,128) block is filled with its already-scaled scalar;
    # combining <= 2 scalars is the only work left outside the kernel.
    return jnp.sum(out[::_SUBLANES, 0])


class FocalLossRegression:
    """JAX/Pallas port of the PyTorch FocalLossRegression module."""

    def __init__(self, values, alpha=1.0, gamma=2.0, num_bins=10,
                 penalty_factor=2.0):
        values = np.asarray(values, dtype=np.float32).reshape(-1)
        self.alpha = float(alpha)
        self.gamma = float(gamma)
        self.num_bins = int(num_bins)
        self.penalty_factor = float(penalty_factor)
        self.min_val = float(values.min())
        self.max_val = float(values.max())

        # Constructor statistics (torch.histogram equivalent): host-side numpy,
        # baked into the kernel as compile-time constants.
        hist, bin_edges = np.histogram(
            values, bins=self.num_bins, range=(self.min_val, self.max_val))
        frequencies = hist.astype(np.float32) / float(len(values))
        for idx in np.where(hist == 0)[0]:
            if idx == 0:
                continue
            frequencies[idx] = frequencies[idx - 1]
        weights = 1.0 / (frequencies + 1.0)
        weights = weights / weights.sum()
        if self.num_bins > 99:
            weights = self._smooth_weights(weights, 9)
        self.bin_edges = tuple(float(e) for e in bin_edges)
        self.weights = tuple(float(w) for w in weights)

        self._num_cores = _num_tensorcores()
        self._forward = jax.jit(functools.partial(
            focal_loss_forward,
            edges=self.bin_edges, weights=self.weights,
            min_val=self.min_val, max_val=self.max_val,
            alpha=self.alpha, gamma=self.gamma,
            penalty_factor=self.penalty_factor,
            num_cores=self._num_cores))

    def __call__(self, predictions, targets):
        return self._forward(predictions, targets)

    @staticmethod
    def _smooth_weights(weights, k):
        pad = k // 2
        wp = np.pad(weights, pad, mode="reflect")
        kernel = np.ones(k, dtype=np.float32) / float(k)
        return np.convolve(wp, kernel, mode="valid").astype(np.float32)


def _reference_forward(predictions, targets, edges, weights,
                       min_val, max_val, alpha, gamma, penalty_factor):
    """Pure-JAX mirror of the PyTorch forward for verification."""
    edges = jnp.asarray(edges, jnp.float32)
    weights = jnp.asarray(weights, jnp.float32)
    err = jnp.abs(predictions - targets)
    idx = jnp.searchsorted(edges[1:], targets, side="right") - 1
    idx = jnp.clip(idx, 0, weights.shape[0] - 1)
    w = weights[idx]
    oob = (predictions < min_val) | (predictions > max_val)
    w = jnp.where(oob, penalty_factor, w)
    return alpha * jnp.mean(w * err ** gamma)


if __name__ == "__main__":
    key = jax.random.PRNGKey(0)
    k_vals, k_t1, k_n1, k_t2, k_n2, k_t3, k_n3 = jax.random.split(key, 7)

    # Constructor statistics (training-target distribution), small & deterministic.
    values = jax.random.uniform(k_vals, (512,), jnp.float32, 0.0, 10.0)
    loss_mod = FocalLossRegression(np.asarray(values), alpha=1.0, gamma=2.0,
                                   num_bins=10, penalty_factor=2.0)

    def check(pred, tgt, rtol):
        got = loss_mod(pred, tgt)
        jax.block_until_ready(got)
        want = _reference_forward(
            pred.astype(jnp.float32), tgt.astype(jnp.float32),
            loss_mod.bin_edges, loss_mod.weights, loss_mod.min_val,
            loss_mod.max_val, loss_mod.alpha, loss_mod.gamma,
            loss_mod.penalty_factor)
        assert jnp.allclose(got, want, rtol=rtol, atol=1e-6), (got, want)

    # 1) Lane-aligned f32, multi-dim shape (fast path: zero wrapper copies).
    t1 = jax.random.uniform(k_t1, (2, 8, 128), jnp.float32, 0.0, 10.0)
    p1 = t1 + 0.75 * jax.random.normal(k_n1, t1.shape, jnp.float32)
    check(p1, t1, 2e-4)

    # 2) Ragged N (exercises padded fallback + in-kernel element mask), with
    #    targets exactly on the bin edges (incl. min/max) and predictions
    #    pushed out of range (penalty path).
    t2 = jax.random.uniform(k_t2, (1000,), jnp.float32, 0.0, 10.0)
    edge_vals = jnp.asarray(loss_mod.bin_edges, jnp.float32)
    t2 = t2.at[:edge_vals.shape[0]].set(edge_vals)
    p2 = t2 + 0.75 * jax.random.normal(k_n2, t2.shape, jnp.float32)
    p2 = p2.at[:edge_vals.shape[0]].set(edge_vals + 0.03)  # last one > max_val
    check(p2, t2, 2e-4)

    # 3) bf16 inputs streamed at half the HBM bytes, upcast inside the kernel.
    t3 = jax.random.uniform(k_t3, (32, 128), jnp.float32, 0.0, 10.0)
    p3 = t3 + 0.75 * jax.random.normal(k_n3, t3.shape, jnp.float32)
    check(p3.astype(jnp.bfloat16), t3.astype(jnp.bfloat16), 1e-3)

    print("KERNEL_OK")
</pallas_src>

<mosaic_0001>
module attributes {stable_mosaic.version = 11 : i64} {
  func.func @_focal_loss_kernel(%arg0: i32, %arg1: i32, %arg2: memref<16x128xf32, #tpu.memory_space<vmem>>, %arg3: memref<16x128xf32, #tpu.memory_space<vmem>>, %arg4: memref<8x128xf32, #tpu.memory_space<vmem>>) attributes {dimension_semantics = [#tpu.dimension_semantics<parallel>, #tpu.dimension_semantics<arbitrary>], iteration_bounds = array<i64: 1, 1>, scalar_prefetch = 0 : i64, scratch_operands = 0 : i64, tpu.core_type = #tpu.core_type<tc>, window_params = [{transform_indices = @transform_0, window_bounds = array<i64: 16, 128>}, {transform_indices = @transform_1, window_bounds = array<i64: 16, 128>}, {transform_indices = @transform_2, window_bounds = array<i64: 8, 128>}]} {
    %c0_i32 = arith.constant 0 : i32
    %0 = arith.cmpi eq, %arg1, %c0_i32 : i32
    %1 = arith.extui %0 : i1 to i32
    %c0_i32_0 = arith.constant 0 : i32
    %2 = arith.cmpi ne, %1, %c0_i32_0 : i32
    scf.if %2 {
      %cst_31 = arith.constant 0.000000e+00 : f32
      %66 = vector.broadcast %cst_31 : f32 to vector<8x128xf32>
      %c0_32 = arith.constant 0 : index
      %c0_33 = arith.constant 0 : index
      %67 = vector.load %arg4[%c0_32, %c0_33] : memref<8x128xf32, #tpu.memory_space<vmem>>, vector<8x128xf32>
      tpu.vector_store %arg4[%c0_32, %c0_33], %66 {strides = array<i32>} : memref<8x128xf32, #tpu.memory_space<vmem>>, vector<8x128xf32>,
    } else {
    }
    %c0 = arith.constant 0 : index
    %c0_1 = arith.constant 0 : index
    %3 = vector.load %arg2[%c0, %c0_1] : memref<16x128xf32, #tpu.memory_space<vmem>>, vector<16x128xf32>
    %c0_2 = arith.constant 0 : index
    %c0_3 = arith.constant 0 : index
    %4 = vector.load %arg3[%c0_2, %c0_3] : memref<16x128xf32, #tpu.memory_space<vmem>>, vector<16x128xf32>
    %5 = arith.subf %3, %4 : vector<16x128xf32>
    %6 = math.absf %5 : vector<16x128xf32>
    %cst = arith.constant 0.100197084 : f32
    %7 = vector.broadcast %cst : f32 to vector<16x128xf32>
    %cst_4 = arith.constant 2.00788689 : f32
    %8 = vector.broadcast %cst_4 : f32 to vector<16x128xf32>
    %9 = arith.cmpf oge, %4, %8 : vector<16x128xf32>
    %cst_5 = arith.constant 9.725520e-02 : f32
    %10 = vector.broadcast %cst_5 : f32 to vector<16x128xf32>
    %11 = arith.select %9, %10, %7 : vector<16x128xi1>, vector<16x128xf32>
    %cst_6 = arith.constant 3.00241518 : f32
    %12 = vector.broadcast %cst_6 : f32 to vector<16x128xf32>
    %13 = arith.cmpf oge, %4, %12 : vector<16x128xf32>
    %cst_7 = arith.constant 0.0993135124 : f32
    %14 = vector.broadcast %cst_7 : f32 to vector<16x128xf32>
    %15 = arith.select %13, %14, %11 : vector<16x128xi1>, vector<16x128xf32>
    %cst_8 = arith.constant 3.99694347 : f32
    %16 = vector.broadcast %cst_8 : f32 to vector<16x128xf32>
    %17 = arith.cmpf oge, %4, %16 : vector<16x128xf32>
    %cst_9 = arith.constant 0.10001912 : f32
    %18 = vector.broadcast %cst_9 : f32 to vector<16x128xf32>
    %19 = arith.select %17, %18, %15 : vector<16x128xi1>, vector<16x128xf32>
    %cst_10 = arith.constant 4.99147177 : f32
    %20 = vector.broadcast %cst_10 : f32 to vector<16x128xf32>
    %21 = arith.cmpf oge, %4, %20 : vector<16x128xf32>
    %cst_11 = arith.constant 0.102383204 : f32
    %22 = vector.broadcast %cst_11 : f32 to vector<16x128xf32>
    %23 = arith.select %21, %22, %19 : vector<16x128xi1>, vector<16x128xf32>
    %cst_12 = arith.constant 5.986000e+00 : f32
    %24 = vector.broadcast %cst_12 : f32 to vector<16x128xf32>
    %25 = arith.cmpf oge, %4, %24 : vector<16x128xf32>
    %cst_13 = arith.constant 0.10037569 : f32
    %26 = vector.broadcast %cst_13 : f32 to vector<16x128xf32>
    %27 = arith.select %25, %26, %23 : vector<16x128xi1>, vector<16x128xf32>
    %cst_14 = arith.constant 6.98052835 : f32
    %28 = vector.broadcast %cst_14 : f32 to vector<16x128xf32>
    %29 = arith.cmpf oge, %4, %28 : vector<16x128xf32>
    %cst_15 = arith.constant 0.10037569 : f32
    %30 = vector.broadcast %cst_15 : f32 to vector<16x128xf32>
    %31 = arith.select %29, %30, %27 : vector<16x128xi1>, vector<16x128xf32>
    %cst_16 = arith.constant 7.97505664 : f32
    %32 = vector.broadcast %cst_16 : f32 to vector<16x128xf32>
    %33 = arith.cmpf oge, %4, %32 : vector<16x128xf32>
    %cst_17 = arith.constant 0.100734815 : f32
    %34 = vector.broadcast %cst_17 : f32 to vector<16x128xf32>
    %35 = arith.select %33, %34, %31 : vector<16x128xi1>, vector<16x128xf32>
    %cst_18 = arith.constant 8.96958542 : f32
    %36 = vector.broadcast %cst_18 : f32 to vector<16x128xf32>
    %37 = arith.cmpf oge, %4, %36 : vector<16x128xf32>
    %cst_19 = arith.constant 0.0987908095 : f32
    %38 = vector.broadcast %cst_19 : f32 to vector<16x128xf32>
    %39 = arith.select %37, %38, %35 : vector<16x128xi1>, vector<16x128xf32>
    %cst_20 = arith.constant 9.96411323 : f32
    %40 = vector.broadcast %cst_20 : f32 to vector<16x128xf32>
    %41 = arith.cmpf oge, %4, %40 : vector<16x128xf32>
    %cst_21 = arith.constant 0.100554936 : f32
    %42 = vector.broadcast %cst_21 : f32 to vector<16x128xf32>
    %43 = arith.select %41, %42, %39 : vector<16x128xi1>, vector<16x128xf32>
    %cst_22 = arith.constant 1.883030e-02 : f32
    %44 = vector.broadcast %cst_22 : f32 to vector<16x128xf32>
    %45 = arith.cmpf olt, %3, %44 : vector<16x128xf32>
    %cst_23 = arith.constant 9.96411323 : f32
    %46 = vector.broadcast %cst_23 : f32 to vector<16x128xf32>
    %47 = arith.cmpf ogt, %3, %46 : vector<16x128xf32>
    %48 = arith.ori %45, %47 : vector<16x128xi1>
    %cst_24 = arith.constant 2.000000e+00 : f32
    %49 = vector.broadcast %cst_24 : f32 to vector<16x128xf32>
    %50 = arith.select %48, %49, %43 : vector<16x128xi1>, vector<16x128xf32>
    %51 = arith.mulf %6, %6 : vector<16x128xf32>
    %52 = arith.mulf %50, %51 : vector<16x128xf32>
    %c1_i32 = arith.constant 1 : i32
    %53 = arith.muli %arg0, %c1_i32 : i32
    %54 = arith.addi %53, %arg1 : i32
    %c2048_i32 = arith.constant 2048 : i32
    %55 = arith.muli %54, %c2048_i32 : i32
    %c2048_i32_25 = arith.constant 2048 : i32
    %56 = arith.addi %55, %c2048_i32_25 : i32
    %c2048_i32_26 = arith.constant 2048 : i32
    %57 = arith.cmpi sle, %56, %c2048_i32_26 : i32
    %58 = arith.extui %57 : i1 to i32
    %c0_i32_27 = arith.constant 0 : i32
    %59 = arith.cmpi ne, %58, %c0_i32_27 : i32
    scf.if %59 {
      %c0_31 = arith.constant 0 : index
      %c0_32 = arith.constant 0 : index
      %66 = vector.load %arg4[%c0_31, %c0_32] : memref<8x128xf32, #tpu.memory_space<vmem>>, vector<8x128xf32>
      %67 = vector.shape_cast %52 : vector<16x128xf32> to vector<2x8x128xf32>
      %cst_33 = arith.constant dense<0.000000e+00> : vector<8x128xf32>
      %68 = vector.multi_reduction <add>, %67, %cst_33 [0] : vector<2x8x128xf32> to vector<8x128xf32>
      %69 = arith.addf %66, %68 : vector<8x128xf32>
      %c0_34 = arith.constant 0 : index
      %c0_35 = arith.constant 0 : index
      %70 = vector.load %arg4[%c0_34, %c0_35] : memref<8x128xf32, #tpu.memory_space<vmem>>, vector<8x128xf32>
      tpu.vector_store %arg4[%c0_34, %c0_35], %69 {strides = array<i32>} : memref<8x128xf32, #tpu.memory_space<vmem>>, vector<8x128xf32>,
    } else {
    }
    %true = arith.constant true
    %60 = arith.xori %57, %true : i1
    %61 = arith.extui %60 : i1 to i32
    %c0_i32_28 = arith.constant 0 : i32
    %62 = arith.cmpi ne, %61, %c0_i32_28 : i32
    scf.if %62 {
      %66 = tpu.iota {dimensions = array<i32: 0>} : vector<16x128xi32>
      %67 = tpu.iota {dimensions = array<i32: 1>} : vector<16x128xi32>
      %c128_i32 = arith.constant 128 : i32
      %68 = vector.broadcast %c128_i32 : i32 to vector<16x128xi32>
      %69 = arith.muli %66, %68 : vector<16x128xi32>
      %70 = arith.addi %69, %67 : vector<16x128xi32>
      %c2048_i32_31 = arith.constant 2048 : i32
      %71 = arith.subi %c2048_i32_31, %55 : i32
      %72 = vector.broadcast %71 : i32 to vector<16x128xi32>
      %73 = arith.cmpi slt, %70, %72 : vector<16x128xi32>
      %cst_32 = arith.constant 0.000000e+00 : f32
      %74 = vector.broadcast %cst_32 : f32 to vector<16x128xf32>
      %75 = arith.select %73, %52, %74 : vector<16x128xi1>, vector<16x128xf32>
      %c0_33 = arith.constant 0 : index
      %c0_34 = arith.constant 0 : index
      %76 = vector.load %arg4[%c0_33, %c0_34] : memref<8x128xf32, #tpu.memory_space<vmem>>, vector<8x128xf32>
      %77 = vector.shape_cast %75 : vector<16x128xf32> to vector<2x8x128xf32>
      %cst_35 = arith.constant dense<0.000000e+00> : vector<8x128xf32>
      %78 = vector.multi_reduction <add>, %77, %cst_35 [0] : vector<2x8x128xf32> to vector<8x128xf32>
      %79 = arith.addf %76, %78 : vector<8x128xf32>
      %c0_36 = arith.constant 0 : index
      %c0_37 = arith.constant 0 : index
      %80 = vector.load %arg4[%c0_36, %c0_37] : memref<8x128xf32, #tpu.memory_space<vmem>>, vector<8x128xf32>
      tpu.vector_store %arg4[%c0_36, %c0_37], %79 {strides = array<i32>} : memref<8x128xf32, #tpu.memory_space<vmem>>, vector<8x128xf32>,
    } else {
    }
    %c0_i32_29 = arith.constant 0 : i32
    %63 = arith.cmpi eq, %arg1, %c0_i32_29 : i32
    %64 = arith.extui %63 : i1 to i32
    %c0_i32_30 = arith.constant 0 : i32
    %65 = arith.cmpi ne, %64, %c0_i32_30 : i32
    scf.if %65 {
      %c0_31 = arith.constant 0 : index
      %c0_32 = arith.constant 0 : index
      %66 = vector.load %arg4[%c0_31, %c0_32] : memref<8x128xf32, #tpu.memory_space<vmem>>, vector<8x128xf32>
      %cst_33 = arith.constant dense<0.000000e+00> : vector<128xf32>
      %67 = vector.multi_reduction <add>, %66, %cst_33 [0] : vector<8x128xf32> to vector<128xf32>
      %68 = vector.shape_cast %67 : vector<128xf32> to vector<1x128xf32>
      %cst_34 = arith.constant dense<0.000000e+00> : vector<1xf32>
      %69 = vector.multi_reduction <add>, %68, %cst_34 [1] : vector<1x128xf32> to vector<1xf32>
      %70 = vector.shape_cast %69 : vector<1xf32> to vector<1x1xf32>
      %cst_35 = arith.constant 4.8828125E-4 : f32
      %71 = vector.broadcast %cst_35 : f32 to vector<1x1xf32>
      %72 = arith.mulf %70, %71 : vector<1x1xf32>
      %73 = vector.shape_cast %72 : vector<1x1xf32> to vector<1x1xf32>
      %74 = vector.broadcast %73 : vector<1x1xf32> to vector<8x128xf32>
      %c0_36 = arith.constant 0 : index
      %c0_37 = arith.constant 0 : index
      %75 = vector.load %arg4[%c0_36, %c0_37] : memref<8x128xf32, #tpu.memory_space<vmem>>, vector<8x128xf32>
      tpu.vector_store %arg4[%c0_36, %c0_37], %74 {strides = array<i32>} : memref<8x128xf32, #tpu.memory_space<vmem>>, vector<8x128xf32>,
    } else {
    }
    return
  }
  func.func @transform_0(%arg0: i32, %arg1: i32) -> (i32, i32) {
    %c1_i32 = arith.constant 1 : i32
    %0 = arith.muli %arg0, %c1_i32 : i32
    %1 = arith.addi %0, %arg1 : i32
    %c0_i32 = arith.constant 0 : i32
    %2 = arith.minsi %1, %c0_i32 : i32
    %c0_i32_0 = arith.constant 0 : i32
    %c0_i32_1 = arith.constant 0 : i32
    return %2, %c0_i32_0 : i32, i32
  }
  func.func @transform_1(%arg0: i32, %arg1: i32) -> (i32, i32) {
    %c1_i32 = arith.constant 1 : i32
    %0 = arith.muli %arg0, %c1_i32 : i32
    %1 = arith.addi %0, %arg1 : i32
    %c0_i32 = arith.constant 0 : i32
    %2 = arith.minsi %1, %c0_i32 : i32
    %c0_i32_0 = arith.constant 0 : i32
    %c0_i32_1 = arith.constant 0 : i32
    return %2, %c0_i32_0 : i32, i32
  }
  func.func @transform_2(%arg0: i32, %arg1: i32) -> (i32, i32) {
    %c0_i32 = arith.constant 0 : i32
    %c0_i32_0 = arith.constant 0 : i32
    return %arg0, %c0_i32 : i32, i32
  }
}

</mosaic_0001>

<llo_original>
// kernel: focal_loss_forward.1
$region0: #{focal_loss_forward.1}
  #allocation0 [shape = 'u32[]', space=smem, size = 0x4, offset = 0x4, fixed_abs, tag = 'smem constant byte address 0x4 - core index']
  #allocation1 [shape = 'u32[144,128]{1,0:T(1,128)}', space=vmem, size = 0x12000, scoped, tag = 'internal scratch']
  %s0 = inlined_call_operand.hbm [shape: f32[16,128], index: 0, kind: input, shape index: {}]
  %s1 = inlined_call_operand.hbm [shape: f32[16,128], index: 1, kind: input, shape index: {}]
  %s2 = inlined_call_operand.vmem [shape: f32[8,128], index: 2, kind: output, shape index: {}]
  %s3 = sld [smem:[#allocation0]]
  $region42: #{focal_loss_forward.1} parent=0
    _
  %s5 = ssub.s32 1, %s3
  %s6 = scalar_select 0, %s5, %s3
  $region1: #{focal_loss_forward.1} parent=0
    #allocation2 [shape = 'u8[8192]{0}', space=vmem, size = 0x2000, scoped, tag = 'input window, operand 0, single buffered']
    #allocation3 [shape = 's32[1]{0}', space=sflag, size = 0x4, scoped, tag = 'scoped memory for focal_loss_forward.1']
    #allocation4 [shape = 'u8[8192]{0}', space=vmem, size = 0x2000, scoped, tag = 'input window, operand 1, single buffered']
    #allocation5 [shape = 's32[1]{0}', space=sflag, size = 0x4, scoped, tag = 'scoped memory for focal_loss_forward.1']
    %7 = vsyncpa [#allocation3], 0
    %8 = vsyncpa [#allocation5], 0
    // Predicated region
    $region2: #{focal_loss_forward.1} parent=1 // pred_check
      _
    $region3: #{focal_loss_forward.1} parent=1 // pred_check_branch
      %10 = sbr.rel (0) target = $region5
    $region4: #{focal_loss_forward.1} parent=1 // pred_region
      %s11 = sadd.s32 0, 0
      %p12 = scmp.lt.s32.totalorder %s11, 0
      %s13 = scalar_select %p12, %s11, 0
      %s14 = smul.u32 2, %s13
      %s16 = ssub.s32 256, 256
      %17 = vsyncadd [#allocation3], %s16
      %s18 = smul.addr %s14, 128
      %s19 = scalar_lea.hbm %s0, %s18
      %s20 = sshll.u32 [#allocation2], 4
      %s21 = int_to_ptr.vmem [resolvable:$true] %s20
      %26 = dma.hbm_to_vmem [thread:$0]  %s19, 256, %s21, [#allocation3], 128, 128, 8
    $region5: #{focal_loss_forward.1} parent=1 // pred_fallthru
      _
    // Predicated region
    $region6: #{focal_loss_forward.1} parent=1 // pred_check
      _
    $region7: #{focal_loss_forward.1} parent=1 // pred_check_branch
      %28 = sbr.rel (0) target = $region9
    $region8: #{focal_loss_forward.1} parent=1 // pred_region
      %s29 = sadd.s32 0, 0
      %p30 = scmp.lt.s32.totalorder %s29, 0
      %s31 = scalar_select %p30, %s29, 0
      %s32 = smul.u32 2, %s31
      %s34 = ssub.s32 256, 256
      %35 = vsyncadd [#allocation5], %s34
      %s36 = smul.addr %s32, 128
      %s37 = scalar_lea.hbm %s1, %s36
      %s38 = sshll.u32 [#allocation4], 4
      %s39 = int_to_ptr.vmem [resolvable:$true] %s38
      %44 = dma.hbm_to_vmem [thread:$0]  %s37, 256, %s39, [#allocation5], 128, 128, 8
    $region9: #{focal_loss_forward.1} parent=1 // pred_fallthru
      _
    // Predicated region
    $region10: #{focal_loss_forward.1} parent=1 // pred_check
      _
    $region11: #{focal_loss_forward.1} parent=1 // pred_check_branch
      %46 = sbr.rel (0) target = $region13
    $region12: #{focal_loss_forward.1} parent=1 // pred_region
      %47 = dma.done [#allocation3], 256
    $region13: #{focal_loss_forward.1} parent=1 // pred_fallthru
      _
    // Predicated region
    $region14: #{focal_loss_forward.1} parent=1 // pred_check
      _
    $region15: #{focal_loss_forward.1} parent=1 // pred_check_branch
      %49 = sbr.rel (0) target = $region17
    $region16: #{focal_loss_forward.1} parent=1 // pred_region
      %50 = dma.done [#allocation5], 256
    $region17: #{focal_loss_forward.1} parent=1 // pred_fallthru
      _
    %s51 = sadd.s32 0, 0
    %p52 = scmp.lt.s32.totalorder %s51, 0
    %s53 = scalar_select %p52, %s51, 0
    %s54 = smul.u32 2, %s53
    %s55 = sadd.s32 0, 0
    %p56 = scmp.lt.s32.totalorder %s55, 0
    %s57 = scalar_select %p56, %s55, 0
    %s58 = smul.u32 2, %s57
    %p59 = scmp.eq.s32.totalorder 0, 0
    // Predicated region
    $region18: #{focal_loss_forward.1} parent=1 // pred_check
      %p60 = pneg %p59
    $region19: #{focal_loss_forward.1} parent=1 // pred_check_branch
      %62 = sbr.rel (%p60) target = $region21
    $region20: #{focal_loss_forward.1} parent=1 // pred_region
      %63 = vst [vmem:[%s2] sm:$0xff] 0.0
    $region21: #{focal_loss_forward.1} parent=1 // pred_fallthru
      _
    %v64 = vld [vmem:[#allocation2] sm:$0xff]
    %v65 = vld [vmem:[#allocation2 + $0x8] sm:$0xff]
    %v66 = vld [vmem:[#allocation4] sm:$0xff]
    %v67 = vld [vmem:[#allocation4 + $0x8] sm:$0xff]
    %v68 = vsub.f32 %v64, %v66
    %v69 = vsub.f32 %v65, %v67
    %v70 = vand.u32 2147483647, %v68
    %v71 = vand.u32 2147483647, %v69
    %vm72 = vcmp.ge.f32.partialorder %v66, 2.007887
    %vm73 = vcmp.ge.f32.partialorder %v67, 2.007887
    %v74 = vsel %vm72, 0.0972552, 0.100197084
    %v75 = vsel %vm73, 0.0972552, 0.100197084
    %vm76 = vcmp.ge.f32.partialorder %v66, 3.0024152
    %vm77 = vcmp.ge.f32.partialorder %v67, 3.0024152
    %v78 = vsel %vm76, 0.09931351, %v74
    %v79 = vsel %vm77, 0.09931351, %v75
    %vm80 = vcmp.ge.f32.partialorder %v66, 3.9969435
    %vm81 = vcmp.ge.f32.partialorder %v67, 3.9969435
    %v82 = vsel %vm80, 0.10001912, %v78
    %v83 = vsel %vm81, 0.10001912, %v79
    %vm84 = vcmp.ge.f32.partialorder %v66, 4.991472
    %vm85 = vcmp.ge.f32.partialorder %v67, 4.991472
    %v86 = vsel %vm84, 0.102383204, %v82
    %v87 = vsel %vm85, 0.102383204, %v83
    %vm88 = vcmp.ge.f32.partialorder %v66, 5.986
    %vm89 = vcmp.ge.f32.partialorder %v67, 5.986
    %v90 = vsel %vm88, 0.10037569, %v86
    %v91 = vsel %vm89, 0.10037569, %v87
    %vm92 = vcmp.ge.f32.partialorder %v66, 6.9805284
    %vm93 = vcmp.ge.f32.partialorder %v67, 6.9805284
    %v94 = vsel %vm92, 0.10037569, %v90
    %v95 = vsel %vm93, 0.10037569, %v91
    %vm96 = vcmp.ge.f32.partialorder %v66, 7.9750566
    %vm97 = vcmp.ge.f32.partialorder %v67, 7.9750566
    %v98 = vsel %vm96, 0.100734815, %v94
    %v99 = vsel %vm97, 0.100734815, %v95
    %vm100 = vcmp.ge.f32.partialorder %v66, 8.969585
    %vm101 = vcmp.ge.f32.partialorder %v67, 8.969585
    %v102 = vsel %vm100, 0.09879081, %v98
    %v103 = vsel %vm101, 0.09879081, %v99
    %vm104 = vcmp.ge.f32.partialorder %v66, 9.964113
    %vm105 = vcmp.ge.f32.partialorder %v67, 9.964113
    %v106 = vsel %vm104, 0.100554936, %v102
    %v107 = vsel %vm105, 0.100554936, %v103
    %vm108 = vcmp.lt.f32.partialorder %v64, 0.0188303
    %vm109 = vcmp.lt.f32.partialorder %v65, 0.0188303
    %vm110 = vcmp.gt.f32.partialorder %v64, 9.964113
    %vm111 = vcmp.gt.f32.partialorder %v65, 9.964113
    %vm112 = vmor %vm108, %vm110
    %vm113 = vmor %vm109, %vm111
    %v114 = vsel %vm112, 2.0, %v106
    %v115 = vsel %vm113, 2.0, %v107
    %v116 = vmul.f32 %v70, %v70
    %v117 = vmul.f32 %v71, %v71
    %v118 = vmul.f32 %v114, %v116
    %v119 = vmul.f32 %v115, %v117
    %s120 = sadd.s32 0, 0
    %s121 = smul.u32 %s120, 2048
    %s122 = sadd.s32 %s121, 2048
    %p123 = scmp.le.s32.totalorder %s122, 2048
    // Predicated region
    $region22: #{focal_loss_forward.1} parent=1 // pred_check
      %p124 = pneg %p123
    $region23: #{focal_loss_forward.1} parent=1 // pred_check_branch
      %126 = sbr.rel (%p124) target = $region25
    $region24: #{focal_loss_forward.1} parent=1 // pred_region
      %v127 = vld [vmem:[%s2] sm:$0xff]
      %v128 = vadd.f32 %v118, %v119
      %v129 = vadd.f32 %v127, %v128
      %130 = vst [vmem:[%s2] sm:$0xff] %v129
    $region25: #{focal_loss_forward.1} parent=1 // pred_fallthru
      _
    %p131 = scmp.gt.s32.totalorder %s122, 2048
    // Predicated region
    $region26: #{focal_loss_forward.1} parent=1 // pred_check
      %p132 = pneg %p131
    $region27: #{focal_loss_forward.1} parent=1 // pred_check_branch
      %134 = sbr.rel (%p132) target = $region29
    $region28: #{focal_loss_forward.1} parent=1 // pred_region
      %v135 = vlaneseq
      %v136 = vshrl.u32 %v135, 7
      %v137 = vadd.s32 %v136, 8
      %v138 = vlaneseq
      %v139 = vand.u32 %v138, 127
      %v140 = vmul.u32 %v136, 128
      %v141 = vmul.u32 %v137, 128
      %v142 = vadd.s32 %v140, %v139
      %v143 = vadd.s32 %v141, %v139
      %s144 = ssub.s32 2048, %s121
      %v145 = vstv %s144
      %vm146 = vcmp.lt.s32.totalorder %v142, %v145
      %vm147 = vcmp.lt.s32.totalorder %v143, %v145
      %v148 = vsel %vm146, %v118, 0.0
      %v149 = vsel %vm147, %v119, 0.0
      %v150 = vld [vmem:[%s2] sm:$0xff]
      %v151 = vadd.f32 %v148, %v149
      %v152 = vadd.f32 %v150, %v151
      %153 = vst [vmem:[%s2] sm:$0xff] %v152
    $region29: #{focal_loss_forward.1} parent=1 // pred_fallthru
      _
    // Predicated region
    $region30: #{focal_loss_forward.1} parent=1 // pred_check
      %p154 = pneg %p59
    $region31: #{focal_loss_forward.1} parent=1 // pred_check_branch
      %156 = sbr.rel (%p154) target = $region33
    $region32: #{focal_loss_forward.1} parent=1 // pred_region
      %v157 = vld [vmem:[%s2] sm:$0xff]
      %v158 = vrot.slane %v157, 4
      %v159 = vadd.f32 %v157, %v158
      %v160 = vrot.slane %v159, 2
      %v161 = vadd.f32 %v159, %v160
      %v162 = vrot.slane %v161, 1
      %v163 = vadd.f32 %v161, %v162
      %164 = vadd.xlane.f32.xlu0 %v163
      %v165 = vpop.xlane.xlu0 %164
      %v166 = vmul.f32 %v165, 0.00048828125
      %167 = vst [vmem:[%s2] sm:$0xff] %v166
    $region33: #{focal_loss_forward.1} parent=1 // pred_fallthru
      _
    // Predicated region
    $region34: #{focal_loss_forward.1} parent=1 // pred_check
      _
    $region35: #{focal_loss_forward.1} parent=1 // pred_check_branch
      %169 = sbr.rel (0) target = $region37
    $region36: #{focal_loss_forward.1} parent=1 // pred_region
      _
    $region37: #{focal_loss_forward.1} parent=1 // pred_fallthru
      _
    // Predicated region
    $region38: #{focal_loss_forward.1} parent=1 // pred_check
      _
    $region39: #{focal_loss_forward.1} parent=1 // pred_check_branch
      %171 = sbr.rel (0) target = $region41
    $region40: #{focal_loss_forward.1} parent=1 // pred_region
      _
    $region41: #{focal_loss_forward.1} parent=1 // pred_fallthru
      _
    %172 = vsyncpa [#allocation3], 1
    %173 = vsyncpa [#allocation5], 1

</llo_original>
